<compile_context>
chip_gen: v7x
topology: tpu7x:2x2x1
jax: 0.10.0
libtpu: 0.0.40
codegen_flags: <defaults>
</compile_context>

<pallas_src>
import functools

import jax
import jax.numpy as jnp
from jax.experimental import pallas as pl
from jax.experimental.pallas import tpu as pltpu


def _round_up(n, m):
    return (n + m - 1) // m * m


def _cdiv(a, b):
    return -(-a // b)


def _actor_kernel(x_ref, w1_ref, b1_ref, w2_ref, b2_ref, w3_ref, b3_ref,
                  o_ref, *, max_action):
    # x arrives f32 from HBM; cast to bf16 in-kernel (VPU has slack under MXU).
    x = x_ref[...].astype(jnp.bfloat16)

    # Layer 1: Linear(state_dim -> H1) + ReLU   (bf16 matmul, f32 accumulate)
    h1 = jnp.dot(x, w1_ref[...], preferred_element_type=jnp.float32)
    h1 = jnp.maximum(h1 + b1_ref[...], 0.0).astype(jnp.bfloat16)

    # Layer 2: Linear(H1 -> H2) + ReLU
    h2 = jnp.dot(h1, w2_ref[...], preferred_element_type=jnp.float32)
    h2 = jnp.maximum(h2 + b2_ref[...], 0.0).astype(jnp.bfloat16)

    # Layer 3: Linear(H2 -> action_dim_padded), then max_action * tanh
    h3 = jnp.dot(h2, w3_ref[...], preferred_element_type=jnp.float32)
    h3 = h3 + b3_ref[...]
    # bf16 store: halves output HBM writeback (the dominant stream here).
    o_ref[...] = (max_action * jnp.tanh(h3)).astype(o_ref.dtype)


def prepare_actor_params(params):
    """One-time pad + cast of the Actor parameters (reuse across calls).

    params: dict with w1 [S,H1], b1 [1,H1], w2 [H1,H2], b2 [1,H2],
            w3 [H2,A], b3 [1,A]   (weights already transposed to in x out)
    """
    state_dim, h1_dim = params["w1"].shape
    h2_dim = params["w2"].shape[1]
    action_dim = params["w3"].shape[1]

    # Lane-pad hidden / output widths (zero padding is numerically inert:
    # relu(0+0)=0, tanh(0)=0, and padded columns are sliced away).
    h1_p = _round_up(h1_dim, 128)
    h2_p = _round_up(h2_dim, 128)
    a_p = _round_up(max(action_dim, 128), 128)

    f32 = jnp.float32
    bf16 = jnp.bfloat16

    prepared = {
        "w1": jnp.pad(params["w1"], ((0, 0), (0, h1_p - h1_dim))).astype(bf16),
        "b1": jnp.pad(params["b1"], ((0, 0), (0, h1_p - h1_dim))).astype(f32),
        "w2": jnp.pad(params["w2"],
                      ((0, h1_p - h1_dim), (0, h2_p - h2_dim))).astype(bf16),
        "b2": jnp.pad(params["b2"], ((0, 0), (0, h2_p - h2_dim))).astype(f32),
        "w3": jnp.pad(params["w3"],
                      ((0, h2_p - h2_dim), (0, a_p - action_dim))).astype(bf16),
        "b3": jnp.pad(params["b3"], ((0, 0), (0, a_p - action_dim))).astype(f32),
        "dims": (state_dim, action_dim, h1_p, h2_p, a_p),
    }
    return prepared


def _choose_batch_tiling(batch, tm_max):
    """Balanced batch tiles: tm multiple of 16, padding < 16 rows per tile,
    and >= 2 tiles for larger batches so v7x's 2 TCs both get work."""
    min_tiles = 2 if batch >= 256 else 1
    n_tiles = max(_cdiv(batch, tm_max), min_tiles)
    tm = _round_up(_cdiv(batch, n_tiles), 16)
    n_tiles = _cdiv(batch, tm)
    batch_p = tm * n_tiles
    return tm, n_tiles, batch_p


def actor_forward(x, prepared, max_action, *, tm_max=1024):
    """Run the Actor MLP forward pass with a Pallas kernel.

    x: [batch, state_dim] float32
    prepared: output of prepare_actor_params()
    """
    batch, state_dim = x.shape
    p_state_dim, action_dim, h1_p, h2_p, a_p = prepared["dims"]
    assert state_dim == p_state_dim, (state_dim, p_state_dim)

    tm, n_tiles, batch_p = _choose_batch_tiling(batch, tm_max)

    # Only batch-pad x (stays f32; bf16 cast happens in-kernel).
    x_p = x if batch_p == batch else jnp.pad(x, ((0, batch_p - batch), (0, 0)))

    w1, b1 = prepared["w1"], prepared["b1"]
    w2, b2 = prepared["w2"], prepared["b2"]
    w3, b3 = prepared["w3"], prepared["b3"]

    # Weights/biases: full-array blocks with a constant index_map so they are
    # DMA'd once and stay resident in VMEM across the batch-tile grid.
    resident = lambda a: pl.BlockSpec(a.shape, lambda i: (0,) * a.ndim)

    kernel = functools.partial(_actor_kernel, max_action=float(max_action))

    out_p = pl.pallas_call(
        kernel,
        out_shape=jax.ShapeDtypeStruct((batch_p, a_p), jnp.bfloat16),
        grid=(n_tiles,),
        in_specs=[
            pl.BlockSpec((tm, state_dim), lambda i: (i, 0)),   # x tile, pipelined
            resident(w1), resident(b1),
            resident(w2), resident(b2),
            resident(w3), resident(b3),
        ],
        out_specs=pl.BlockSpec((tm, a_p), lambda i: (i, 0)),   # lane-dense bf16 store
        compiler_params=pltpu.CompilerParams(
            dimension_semantics=("parallel",),   # megacore split on v7x
            vmem_limit_bytes=32 << 20,           # safe headroom even on v7x (64 MiB)
        ),
    )(x_p, w1, b1, w2, b2, w3, b3)

    # Slice real rows / action columns and hand callers f32.
    return out_p[:batch, :action_dim].astype(jnp.float32)


def init_actor_params(key, state_dim, action_dim):
    """Deterministic init mimicking nn.Linear default (uniform +/- 1/sqrt(fan_in))."""
    def linear(key, fan_in, fan_out):
        kw, kb = jax.random.split(key)
        bound = 1.0 / jnp.sqrt(fan_in)
        # stored transposed: [fan_in, fan_out]
        w = jax.random.uniform(kw, (fan_in, fan_out), jnp.float32, -bound, bound)
        b = jax.random.uniform(kb, (1, fan_out), jnp.float32, -bound, bound)
        return w, b

    k1, k2, k3 = jax.random.split(key, 3)
    w1, b1 = linear(k1, state_dim, 400)
    w2, b2 = linear(k2, 400, 300)
    w3, b3 = linear(k3, 300, action_dim)
    return {"w1": w1, "b1": b1, "w2": w2, "b2": b2, "w3": w3, "b3": b3}


def actor_reference(x, params, max_action):
    """Pure-JAX f32 reference for validation."""
    h = jnp.maximum(x @ params["w1"] + params["b1"], 0.0)
    h = jnp.maximum(h @ params["w2"] + params["b2"], 0.0)
    return max_action * jnp.tanh(h @ params["w3"] + params["b3"])


if __name__ == "__main__":
    batch = 2
    state_dim = 32
    action_dim = 8
    max_action = 2.0

    key = jax.random.PRNGKey(0)
    kx, kp = jax.random.split(key)
    x = jax.random.normal(kx, (batch, state_dim), dtype=jnp.float32)
    params = init_actor_params(kp, state_dim, action_dim)

    prepared = prepare_actor_params(params)   # one-time pad/cast, reused per call
    out = actor_forward(x, prepared, max_action)
    out = jax.block_until_ready(out)

    ref = actor_reference(x, params, max_action)
    assert out.shape == (batch, action_dim), out.shape
    # bf16 weights/activations/output with f32 accumulation on a tanh-bounded
    # [-max_action, max_action] output: allow a few 1e-2 of absolute error.
    max_diff = float(jnp.max(jnp.abs(out - ref)))
    assert max_diff < 7.5e-2, f"mismatch vs reference: max abs diff = {max_diff}"

    print("KERNEL_OK")
</pallas_src>

<mosaic_0001>
module attributes {stable_mosaic.version = 11 : i64} {
  func.func @_actor_kernel(%arg0: i32, %arg1: memref<16x32xf32, #tpu.memory_space<vmem>>, %arg2: memref<32x512xbf16, #tpu.memory_space<vmem>>, %arg3: memref<1x512xf32, #tpu.memory_space<vmem>>, %arg4: memref<512x384xbf16, #tpu.memory_space<vmem>>, %arg5: memref<1x384xf32, #tpu.memory_space<vmem>>, %arg6: memref<384x128xbf16, #tpu.memory_space<vmem>>, %arg7: memref<1x128xf32, #tpu.memory_space<vmem>>, %arg8: memref<16x128xbf16, #tpu.memory_space<vmem>>) attributes {dimension_semantics = [#tpu.dimension_semantics<parallel>], iteration_bounds = array<i64: 1>, scalar_prefetch = 0 : i64, scratch_operands = 0 : i64, tpu.core_type = #tpu.core_type<tc>, window_params = [{transform_indices = @transform_0, window_bounds = array<i64: 16, 32>}, {pipeline_mode = #tpu.pipeline_mode<synchronous>, transform_indices = @transform_1, window_bounds = array<i64: 32, 512>}, {pipeline_mode = #tpu.pipeline_mode<synchronous>, transform_indices = @transform_2, window_bounds = array<i64: 1, 512>}, {pipeline_mode = #tpu.pipeline_mode<synchronous>, transform_indices = @transform_3, window_bounds = array<i64: 512, 384>}, {pipeline_mode = #tpu.pipeline_mode<synchronous>, transform_indices = @transform_4, window_bounds = array<i64: 1, 384>}, {pipeline_mode = #tpu.pipeline_mode<synchronous>, transform_indices = @transform_5, window_bounds = array<i64: 384, 128>}, {pipeline_mode = #tpu.pipeline_mode<synchronous>, transform_indices = @transform_6, window_bounds = array<i64: 1, 128>}, {transform_indices = @transform_7, window_bounds = array<i64: 16, 128>}]} {
    %c0 = arith.constant 0 : index
    %c0_0 = arith.constant 0 : index
    %0 = vector.load %arg1[%c0, %c0_0] : memref<16x32xf32, #tpu.memory_space<vmem>>, vector<16x32xf32>
    %1 = arith.truncf %0 : vector<16x32xf32> to vector<16x32xbf16>
    %c0_1 = arith.constant 0 : index
    %c0_2 = arith.constant 0 : index
    %2 = vector.load %arg2[%c0_1, %c0_2] : memref<32x512xbf16, #tpu.memory_space<vmem>>, vector<32x512xbf16>
    %cst = arith.constant dense<0.000000e+00> : vector<16x512xf32>
    %3 = tpu.matmul %1, %2, %cst {dimension_numbers = #tpu.dot_dimension_numbers<[1], [0], [0], [1], [0, 0, 1, 1], [], []>} : vector<16x32xbf16>, vector<32x512xbf16>, vector<16x512xf32> -> vector<16x512xf32>
    %c0_3 = arith.constant 0 : index
    %c0_4 = arith.constant 0 : index
    %4 = vector.load %arg3[%c0_3, %c0_4] : memref<1x512xf32, #tpu.memory_space<vmem>>, vector<1x512xf32>
    %5 = vector.broadcast %4 : vector<1x512xf32> to vector<16x512xf32>
    %6 = arith.addf %3, %5 : vector<16x512xf32>
    %cst_5 = arith.constant 0.000000e+00 : f32
    %7 = vector.broadcast %cst_5 : f32 to vector<16x512xf32>
    %8 = arith.maximumf %6, %7 : vector<16x512xf32>
    %9 = arith.truncf %8 : vector<16x512xf32> to vector<16x512xbf16>
    %c0_6 = arith.constant 0 : index
    %c0_7 = arith.constant 0 : index
    %10 = vector.load %arg4[%c0_6, %c0_7] : memref<512x384xbf16, #tpu.memory_space<vmem>>, vector<512x384xbf16>
    %cst_8 = arith.constant dense<0.000000e+00> : vector<16x384xf32>
    %11 = tpu.matmul %9, %10, %cst_8 {dimension_numbers = #tpu.dot_dimension_numbers<[1], [0], [0], [1], [0, 0, 1, 1], [], []>} : vector<16x512xbf16>, vector<512x384xbf16>, vector<16x384xf32> -> vector<16x384xf32>
    %c0_9 = arith.constant 0 : index
    %c0_10 = arith.constant 0 : index
    %12 = vector.load %arg5[%c0_9, %c0_10] : memref<1x384xf32, #tpu.memory_space<vmem>>, vector<1x384xf32>
    %13 = vector.broadcast %12 : vector<1x384xf32> to vector<16x384xf32>
    %14 = arith.addf %11, %13 : vector<16x384xf32>
    %cst_11 = arith.constant 0.000000e+00 : f32
    %15 = vector.broadcast %cst_11 : f32 to vector<16x384xf32>
    %16 = arith.maximumf %14, %15 : vector<16x384xf32>
    %17 = arith.truncf %16 : vector<16x384xf32> to vector<16x384xbf16>
    %c0_12 = arith.constant 0 : index
    %c0_13 = arith.constant 0 : index
    %18 = vector.load %arg6[%c0_12, %c0_13] : memref<384x128xbf16, #tpu.memory_space<vmem>>, vector<384x128xbf16>
    %cst_14 = arith.constant dense<0.000000e+00> : vector<16x128xf32>
    %19 = tpu.matmul %17, %18, %cst_14 {dimension_numbers = #tpu.dot_dimension_numbers<[1], [0], [0], [1], [0, 0, 1, 1], [], []>} : vector<16x384xbf16>, vector<384x128xbf16>, vector<16x128xf32> -> vector<16x128xf32>
    %c0_15 = arith.constant 0 : index
    %c0_16 = arith.constant 0 : index
    %20 = vector.load %arg7[%c0_15, %c0_16] : memref<1x128xf32, #tpu.memory_space<vmem>>, vector<1x128xf32>
    %21 = vector.broadcast %20 : vector<1x128xf32> to vector<16x128xf32>
    %22 = arith.addf %19, %21 : vector<16x128xf32>
    %23 = math.tanh %22 : vector<16x128xf32>
    %cst_17 = arith.constant 2.000000e+00 : f32
    %24 = vector.broadcast %cst_17 : f32 to vector<16x128xf32>
    %25 = arith.mulf %24, %23 : vector<16x128xf32>
    %26 = arith.truncf %25 : vector<16x128xf32> to vector<16x128xbf16>
    %c0_18 = arith.constant 0 : index
    %c0_19 = arith.constant 0 : index
    %27 = vector.load %arg8[%c0_18, %c0_19] : memref<16x128xbf16, #tpu.memory_space<vmem>>, vector<16x128xbf16>
    tpu.vector_store %arg8[%c0_18, %c0_19], %26 {strides = array<i32>} : memref<16x128xbf16, #tpu.memory_space<vmem>>, vector<16x128xbf16>,
    return
  }
  func.func @transform_0(%arg0: i32) -> (i32, i32) {
    %c0_i32 = arith.constant 0 : i32
    %c0_i32_0 = arith.constant 0 : i32
    return %arg0, %c0_i32 : i32, i32
  }
  func.func @transform_1(%arg0: i32) -> (i32, i32) {
    %c0_i32 = arith.constant 0 : i32
    %c0_i32_0 = arith.constant 0 : i32
    %c0_i32_1 = arith.constant 0 : i32
    return %c0_i32, %c0_i32_0 : i32, i32
  }
  func.func @transform_2(%arg0: i32) -> (i32, i32) {
    %c0_i32 = arith.constant 0 : i32
    %c0_i32_0 = arith.constant 0 : i32
    %c0_i32_1 = arith.constant 0 : i32
    return %c0_i32, %c0_i32_0 : i32, i32
  }
  func.func @transform_3(%arg0: i32) -> (i32, i32) {
    %c0_i32 = arith.constant 0 : i32
    %c0_i32_0 = arith.constant 0 : i32
    %c0_i32_1 = arith.constant 0 : i32
    return %c0_i32, %c0_i32_0 : i32, i32
  }
  func.func @transform_4(%arg0: i32) -> (i32, i32) {
    %c0_i32 = arith.constant 0 : i32
    %c0_i32_0 = arith.constant 0 : i32
    %c0_i32_1 = arith.constant 0 : i32
    return %c0_i32, %c0_i32_0 : i32, i32
  }
  func.func @transform_5(%arg0: i32) -> (i32, i32) {
    %c0_i32 = arith.constant 0 : i32
    %c0_i32_0 = arith.constant 0 : i32
    %c0_i32_1 = arith.constant 0 : i32
    return %c0_i32, %c0_i32_0 : i32, i32
  }
  func.func @transform_6(%arg0: i32) -> (i32, i32) {
    %c0_i32 = arith.constant 0 : i32
    %c0_i32_0 = arith.constant 0 : i32
    %c0_i32_1 = arith.constant 0 : i32
    return %c0_i32, %c0_i32_0 : i32, i32
  }
  func.func @transform_7(%arg0: i32) -> (i32, i32) {
    %c0_i32 = arith.constant 0 : i32
    %c0_i32_0 = arith.constant 0 : i32
    return %arg0, %c0_i32 : i32, i32
  }
}

</mosaic_0001>

<llo_original>
// kernel: tpu_custom_call.1
$region0: #{tpu_custom_call.1}
  #allocation0 [shape = 'u32[]', space=smem, size = 0x4, offset = 0x4, fixed_abs, tag = 'smem constant byte address 0x4 - core index']
  #allocation1 [shape = 'u32[144,128]{1,0:T(1,128)}', space=vmem, size = 0x12000, scoped, tag = 'internal scratch']
  %s0 = inlined_call_operand.hbm [shape: f32[16,32], index: 0, kind: input, shape index: {}]
  %s1 = inlined_call_operand.hbm [shape: bf16[32,512], index: 1, kind: input, shape index: {}]
  %s2 = inlined_call_operand.vmem [shape: f32[1,512], index: 2, kind: input, shape index: {}]
  %s3 = inlined_call_operand.hbm [shape: bf16[512,384], index: 3, kind: input, shape index: {}]
  %s4 = inlined_call_operand.vmem [shape: f32[1,384], index: 4, kind: input, shape index: {}]
  %s5 = inlined_call_operand.hbm [shape: bf16[384,128], index: 5, kind: input, shape index: {}]
  %s6 = inlined_call_operand.vmem [shape: f32[1,128], index: 6, kind: input, shape index: {}]
  %s7 = inlined_call_operand.hbm [shape: bf16[16,128], index: 7, kind: output, shape index: {}]
  %s8 = sld [smem:[#allocation0]]
  $region54: #{tpu_custom_call.1} parent=0
    _
  %s10 = ssub.s32 1, %s8
  %s11 = scalar_select 0, %s10, %s8
  $region1: #{tpu_custom_call.1} parent=0
    #allocation2 [shape = 'u8[8192]{0}', space=vmem, size = 0x2000, scoped, tag = 'input window, operand 0, single buffered']
    #allocation3 [shape = 's32[1]{0}', space=sflag, size = 0x4, scoped, tag = 'scoped memory for tpu_custom_call.1']
    #allocation4 [shape = 's32[1]{0}', space=sflag, size = 0x4, scoped, tag = 'scoped memory for tpu_custom_call.1']
    #allocation5 [shape = 'u8[32768]{0}', space=vmem, size = 0x8000, scoped, tag = 'input window, operand 1, single buffered']
    #allocation6 [shape = 's32[1]{0}', space=sflag, size = 0x4, scoped, tag = 'scoped memory for tpu_custom_call.1']
    #allocation7 [shape = 'u8[393216]{0}', space=vmem, size = 0x60000, scoped, tag = 'input window, operand 3, single buffered']
    #allocation8 [shape = 'u8[98304]{0}', space=vmem, size = 0x18000, scoped, tag = 'input window, operand 5, single buffered']
    #allocation9 [shape = 's32[1]{0}', space=sflag, size = 0x4, scoped, tag = 'scoped memory for tpu_custom_call.1']
    #allocation10 [shape = 'u8[4096]{0}', space=vmem, size = 0x1000, scoped, tag = 'output window, operand 0, single buffered']
    %12 = vsyncpa [#allocation3], 0
    %13 = vsyncpa [#allocation6], 0
    %14 = vsyncpa [#allocation9], 0
    %15 = vsyncpa [#allocation4], 0
    // Predicated region
    $region2: #{tpu_custom_call.1} parent=1 // pred_check
      _
    $region3: #{tpu_custom_call.1} parent=1 // pred_check_branch
      %17 = sbr.rel (0) target = $region5
    $region4: #{tpu_custom_call.1} parent=1 // pred_region
      %s19 = ssub.s32 256, 256
      %20 = vsyncadd [#allocation3], %s19
      %s21 = sshll.u32 [#allocation2], 4
      %s22 = int_to_ptr.vmem [resolvable:$true] %s21
      %27 = dma.hbm_to_vmem [thread:$0]  %s0, 256, %s22, [#allocation3], 128, 128, 8
    $region5: #{tpu_custom_call.1} parent=1 // pred_fallthru
      _
    // Predicated region
    $region6: #{tpu_custom_call.1} parent=1 // pred_check
      _
    $region7: #{tpu_custom_call.1} parent=1 // pred_check_branch
      %29 = sbr.rel (0) target = $region9
    $region8: #{tpu_custom_call.1} parent=1 // pred_region
      %s31 = ssub.s32 1024, 1024
      %32 = vsyncadd [#allocation6], %s31
      %s33 = sshll.u32 [#allocation5], 4
      %s34 = int_to_ptr.vmem [resolvable:$true] %s33
      %39 = dma.hbm_to_vmem [thread:$0]  %s1, 1024, %s34, [#allocation6], 256, 256, 16
    $region9: #{tpu_custom_call.1} parent=1 // pred_fallthru
      _
    // Predicated region
    $region10: #{tpu_custom_call.1} parent=1 // pred_check
      _
    $region11: #{tpu_custom_call.1} parent=1 // pred_check_branch
      %41 = sbr.rel (0) target = $region13
    $region12: #{tpu_custom_call.1} parent=1 // pred_region
      _
    $region13: #{tpu_custom_call.1} parent=1 // pred_fallthru
      _
    // Predicated region
    $region14: #{tpu_custom_call.1} parent=1 // pred_check
      _
    $region15: #{tpu_custom_call.1} parent=1 // pred_check_branch
      %43 = sbr.rel (0) target = $region17
    $region16: #{tpu_custom_call.1} parent=1 // pred_region
      %s45 = ssub.s32 12288, 12288
      %46 = vsyncadd [#allocation6], %s45
      %s47 = sshll.u32 [#allocation7], 4
      %s48 = int_to_ptr.vmem [resolvable:$true] %s47
      %53 = dma.hbm_to_vmem [thread:$0]  %s3, 12288, %s48, [#allocation6], 192, 192, 12
    $region17: #{tpu_custom_call.1} parent=1 // pred_fallthru
      _
    // Predicated region
    $region18: #{tpu_custom_call.1} parent=1 // pred_check
      _
    $region19: #{tpu_custom_call.1} parent=1 // pred_check_branch
      %55 = sbr.rel (0) target = $region21
    $region20: #{tpu_custom_call.1} parent=1 // pred_region
      _
    $region21: #{tpu_custom_call.1} parent=1 // pred_fallthru
      _
    // Predicated region
    $region22: #{tpu_custom_call.1} parent=1 // pred_check
      _
    $region23: #{tpu_custom_call.1} parent=1 // pred_check_branch
      %57 = sbr.rel (0) target = $region25
    $region24: #{tpu_custom_call.1} parent=1 // pred_region
      %s59 = ssub.s32 3072, 3072
      %60 = vsyncadd [#allocation9], %s59
      %s61 = sshll.u32 [#allocation8], 4
      %s62 = int_to_ptr.vmem [resolvable:$true] %s61
      %67 = dma.hbm_to_vmem [thread:$0]  %s5, 3072, %s62, [#allocation9], 64, 64, 4
    $region25: #{tpu_custom_call.1} parent=1 // pred_fallthru
      _
    // Predicated region
    $region26: #{tpu_custom_call.1} parent=1 // pred_check
      _
    $region27: #{tpu_custom_call.1} parent=1 // pred_check_branch
      %69 = sbr.rel (0) target = $region29
    $region28: #{tpu_custom_call.1} parent=1 // pred_region
      _
    $region29: #{tpu_custom_call.1} parent=1 // pred_fallthru
      _
    // Predicated region
    $region30: #{tpu_custom_call.1} parent=1 // pred_check
      _
    $region31: #{tpu_custom_call.1} parent=1 // pred_check_branch
      %71 = sbr.rel (0) target = $region33
    $region32: #{tpu_custom_call.1} parent=1 // pred_region
      %72 = dma.done [#allocation3], 256
    $region33: #{tpu_custom_call.1} parent=1 // pred_fallthru
      _
    // Predicated region
    $region34: #{tpu_custom_call.1} parent=1 // pred_check
      _
    $region35: #{tpu_custom_call.1} parent=1 // pred_check_branch
      %74 = sbr.rel (0) target = $region37
    $region36: #{tpu_custom_call.1} parent=1 // pred_region
      %75 = dma.done [#allocation6], 1024
    $region37: #{tpu_custom_call.1} parent=1 // pred_fallthru
      _
    // Predicated region
    $region38: #{tpu_custom_call.1} parent=1 // pred_check
      _
    $region39: #{tpu_custom_call.1} parent=1 // pred_check_branch
      %77 = sbr.rel (0) target = $region41
    $region40: #{tpu_custom_call.1} parent=1 // pred_region
      %78 = dma.done [#allocation6], 12288
    $region41: #{tpu_custom_call.1} parent=1 // pred_fallthru
      _
    // Predicated region
    $region42: #{tpu_custom_call.1} parent=1 // pred_check
      _
    $region43: #{tpu_custom_call.1} parent=1 // pred_check_branch
      %80 = sbr.rel (0) target = $region45
    $region44: #{tpu_custom_call.1} parent=1 // pred_region
      %81 = dma.done [#allocation9], 3072
    $region45: #{tpu_custom_call.1} parent=1 // pred_fallthru
      _
    %v83 = vld [vmem:[#allocation2] sm:$0xff]
    %v84 = vld [vmem:[#allocation2 + $0x8] sm:$0xff]
    %v85 = vpack.c.bf16 %v84, %v83
    %v86 = vld [vmem:[#allocation5] sm:$0xff]
    %v87 = vld [vmem:[#allocation5 + $0x8] sm:$0xff]
    %v88 = vld [vmem:[#allocation5 + $0x10] sm:$0xff]
    %v89 = vld [vmem:[#allocation5 + $0x18] sm:$0xff]
    %v90 = vld [vmem:[#allocation5 + $0x20] sm:$0xff]
    %v91 = vld [vmem:[#allocation5 + $0x28] sm:$0xff]
    %v92 = vld [vmem:[#allocation5 + $0x30] sm:$0xff]
    %v93 = vld [vmem:[#allocation5 + $0x38] sm:$0xff]
    %v94 = vld [vmem:[%s2] sm:$0xf]
    %v96 = vlaneseq
    %v97 = vshrl.u32 %v96, 7
    %v98 = vsub.s32 0, %v97
    %v99 = vrot.slane %v94, %v98
    %v100 = vlaneseq
    %v101 = vshrl.u32 %v100, 7
    %v102 = vsub.s32 1, %v101
    %v103 = vrot.slane %v94, %v102
    %v104 = vlaneseq
    %v105 = vshrl.u32 %v104, 7
    %v106 = vsub.s32 2, %v105
    %v107 = vrot.slane %v94, %v106
    %v108 = vlaneseq
    %v109 = vshrl.u32 %v108, 7
    %v110 = vsub.s32 3, %v109
    %v111 = vrot.slane %v94, %v110
    %v124 = vunpack.c.l.b16 %v86
    %v125 = vunpack.c.h.b16 %v86
    %v126 = vunpack.c.l.b16 %v87
    %v127 = vunpack.c.h.b16 %v87
    %v128 = vunpack.c.l.b16 %v88
    %v129 = vunpack.c.h.b16 %v88
    %v130 = vunpack.c.l.b16 %v89
    %v131 = vunpack.c.h.b16 %v89
    %v132 = vunpack.c.l.b16 %v90
    %v133 = vunpack.c.h.b16 %v90
    %v134 = vunpack.c.l.b16 %v91
    %v135 = vunpack.c.h.b16 %v91
    %v136 = vunpack.c.l.b16 %v92
    %v137 = vunpack.c.h.b16 %v92
    %v138 = vunpack.c.l.b16 %v93
    %v139 = vunpack.c.h.b16 %v93
    %v140 = vpack.c.b16 %v128, %v124
    %v141 = vpack.c.b16 %v129, %v125
    %v142 = vpack.c.b16 %v130, %v126
    %v143 = vpack.c.b16 %v131, %v127
    %v144 = vpack.c.b16 %v136, %v132
    %v145 = vpack.c.b16 %v137, %v133
    %v146 = vpack.c.b16 %v138, %v134
    %v147 = vpack.c.b16 %v139, %v135
    %vm156 = vcmask 261120
    %v158 = vsel %vm156, %v85, 0
    %160 = vmatprep.subr.bf16.mxu0 %v141
    %161 = vmatpush1.bf16.msra.mxu0 %v140
    %162 = vmatprep.subr.bf16.mxu0 %v145
    %163 = vmatpush1.bf16.msra.mxu0 %v144
    %164 = vmatprep.subr.bf16.mxu0 0
    %165 = vmatpush1.bf16.msra.mxu0 0
    %166 = vmatprep.subr.bf16.mxu0 0
    %167 = vmatpush1.bf16.msra.mxu0 0
    %168 = vmatprep.subr.bf16.mxu0 0
    %169 = vmatpush1.bf16.msra.mxu0 0
    %170 = vmatprep.subr.bf16.mxu0 0
    %171 = vmatpush1.bf16.msra.mxu0 0
    %172 = vmatprep.subr.bf16.mxu0 0
    %173 = vmatpush1.bf16.msra.mxu0 0
    %174 = vmatprep.subr.bf16.mxu0 0
    %175 = vmatpush1.bf16.msra.mxu0 0
    %176 = vmatprep.subr.bf16.mxu0 0
    %177 = vmatpush1.bf16.msra.mxu0 0
    %178 = vmatprep.subr.bf16.mxu0 0
    %179 = vmatpush1.bf16.msra.mxu0 0
    %180 = vmatprep.subr.bf16.mxu0 0
    %181 = vmatpush1.bf16.msra.mxu0 0
    %182 = vmatprep.subr.bf16.mxu0 0
    %183 = vmatpush1.bf16.msra.mxu0 0
    %184 = vmatprep.subr.bf16.mxu0 0
    %185 = vmatpush1.bf16.msra.mxu0 0
    %186 = vmatprep.subr.bf16.mxu0 0
    %187 = vmatpush1.bf16.msra.mxu0 0
    %188 = vmatprep.subr.bf16.mxu0 0
    %189 = vmatpush1.bf16.msra.mxu0 0
    %190 = vmatprep.subr.bf16.mxu0 0
    %191 = vmatpush1.bf16.msra.mxu0 0
    %192 = vmatprep.mubr.bf16.mxu0 0
    %193 = vmatmul.mubr.bf16.gmra.mrb[0].mxu0 %v158
    %v194 = vpop.f32.mrb[0].mxu0
    %v195 = vadd.f32 %v99, %v194
    %v196 = vpop.f32.mrb[0].mxu0
    %v197 = vadd.f32 %v103, %v196
    %v198 = vpop.f32.mrb[0].mxu0
    %v199 = vadd.f32 %v99, %v198
    %v200 = vpop.f32.mrb[0].mxu0
    %v201 = vadd.f32 %v103, %v200
    %202 = vdwg.mxu0
    %203 = vmatprep.subr.bf16.mxu0 %v143
    %204 = vmatpush1.bf16.msra.mxu0 %v142
    %205 = vmatprep.subr.bf16.mxu0 %v147
    %206 = vmatpush1.bf16.msra.mxu0 %v146
    %207 = vmatprep.subr.bf16.mxu0 0
    %208 = vmatpush1.bf16.msra.mxu0 0
    %209 = vmatprep.subr.bf16.mxu0 0
    %210 = vmatpush1.bf16.msra.mxu0 0
    %211 = vmatprep.subr.bf16.mxu0 0
    %212 = vmatpush1.bf16.msra.mxu0 0
    %213 = vmatprep.subr.bf16.mxu0 0
    %214 = vmatpush1.bf16.msra.mxu0 0
    %215 = vmatprep.subr.bf16.mxu0 0
    %216 = vmatpush1.bf16.msra.mxu0 0
    %217 = vmatprep.subr.bf16.mxu0 0
    %218 = vmatpush1.bf16.msra.mxu0 0
    %219 = vmatprep.subr.bf16.mxu0 0
    %220 = vmatpush1.bf16.msra.mxu0 0
    %221 = vmatprep.subr.bf16.mxu0 0
    %222 = vmatpush1.bf16.msra.mxu0 0
    %223 = vmatprep.subr.bf16.mxu0 0
    %224 = vmatpush1.bf16.msra.mxu0 0
    %225 = vmatprep.subr.bf16.mxu0 0
    %226 = vmatpush1.bf16.msra.mxu0 0
    %227 = vmatprep.subr.bf16.mxu0 0
    %228 = vmatpush1.bf16.msra.mxu0 0
    %229 = vmatprep.subr.bf16.mxu0 0
    %230 = vmatpush1.bf16.msra.mxu0 0
    %231 = vmatprep.subr.bf16.mxu0 0
    %232 = vmatpush1.bf16.msra.mxu0 0
    %233 = vmatprep.subr.bf16.mxu0 0
    %234 = vmatpush1.bf16.msra.mxu0 0
    %235 = vmatprep.mubr.bf16.mxu0 0
    %236 = vmatmul.mubr.bf16.gmra.mrb[0].mxu0 %v158
    %v237 = vpop.f32.mrb[0].mxu0
    %v238 = vadd.f32 %v107, %v237
    %v239 = vpop.f32.mrb[0].mxu0
    %v240 = vadd.f32 %v111, %v239
    %v241 = vpop.f32.mrb[0].mxu0
    %v242 = vadd.f32 %v107, %v241
    %v243 = vpop.f32.mrb[0].mxu0
    %v244 = vadd.f32 %v111, %v243
    %245 = vdwg.mxu0
    %v246 = vmax.f32 %v195, 0.0
    %v247 = vmax.f32 %v197, 0.0
    %v248 = vmax.f32 %v238, 0.0
    %v249 = vmax.f32 %v240, 0.0
    %v250 = vmax.f32 %v199, 0.0
    %v251 = vmax.f32 %v201, 0.0
    %v252 = vmax.f32 %v242, 0.0
    %v253 = vmax.f32 %v244, 0.0
    %v254 = vpack.c.bf16 %v250, %v246
    %v255 = vpack.c.bf16 %v251, %v247
    %v256 = vpack.c.bf16 %v252, %v248
    %v257 = vpack.c.bf16 %v253, %v249
    %v258 = vld [vmem:[#allocation7] sm:$0xff]
    %v259 = vld [vmem:[#allocation7 + $0x8] sm:$0xf]
    %v260 = vld [vmem:[#allocation7 + $0xc] sm:$0xff]
    %v261 = vld [vmem:[#allocation7 + $0x14] sm:$0xf]
    %v262 = vld [vmem:[#allocation7 + $0x18] sm:$0xff]
    %v263 = vld [vmem:[#allocation7 + $0x20] sm:$0xf]
    %v264 = vld [vmem:[#allocation7 + $0x24] sm:$0xff]
    %v265 = vld [vmem:[#allocation7 + $0x2c] sm:$0xf]
    %v266 = vld [vmem:[#allocation7 + $0x30] sm:$0xff]
    %v267 = vld [vmem:[#allocation7 + $0x38] sm:$0xf]
    %v268 = vld [vmem:[#allocation7 + $0x3c] sm:$0xff]
    %v269 = vld [vmem:[#allocation7 + $0x44] sm:$0xf]
    %v270 = vld [vmem:[#allocation7 + $0x48] sm:$0xff]
    %v271 = vld [vmem:[#allocation7 + $0x50] sm:$0xf]
    %v272 = vld [vmem:[#allocation7 + $0x54] sm:$0xff]
    %v273 = vld [vmem:[#allocation7 + $0x5c] sm:$0xf]
    %v274 = vld [vmem:[#allocation7 + $0x60] sm:$0xff]
    %v275 = vld [vmem:[#allocation7 + $0x68] sm:$0xf]
    %v276 = vld [vmem:[#allocation7 + $0x6c] sm:$0xff]
    %v277 = vld [vmem:[#allocation7 + $0x74] sm:$0xf]
    %v278 = vld [vmem:[#allocation7 + $0x78] sm:$0xff]
    %v279 = vld [vmem:[#allocation7 + $0x80] sm:$0xf]
    %v280 = vld [vmem:[#allocation7 + $0x84] sm:$0xff]
    %v281 = vld [vmem:[#allocation7 + $0x8c] sm:$0xf]
    %v282 = vld [vmem:[#allocation7 + $0x90] sm:$0xff]
    %v283 = vld [vmem:[#allocation7 + $0x98] sm:$0xf]
    %v284 = vld [vmem:[#allocation7 + $0x9c] sm:$0xff]
    %v285 = vld [vmem:[#allocation7 + $0xa4] sm:$0xf]
    %v286 = vld [vmem:[#allocation7 + $0xa8] sm:$0xff]
    %v287 = vld [vmem:[#allocation7 + $0xb0] sm:$0xf]
    %v288 = vld [vmem:[#allocation7 + $0xb4] sm:$0xff]
    %v289 = vld [vmem:[#allocation7 + $0xbc] sm:$0xf]
    %v290 = vld [vmem:[#allocation7 + $0xc0] sm:$0xff]
    %v291 = vld [vmem:[#allocation7 + $0xc8] sm:$0xf]
    %v292 = vld [vmem:[#allocation7 + $0xcc] sm:$0xff]
    %v293 = vld [vmem:[#allocation7 + $0xd4] sm:$0xf]
    %v294 = vld [vmem:[#allocation7 + $0xd8] sm:$0xff]
    %v295 = vld [vmem:[#allocation7 + $0xe0] sm:$0xf]
    %v296 = vld [vmem:[#allocation7 + $0xe4] sm:$0xff]
    %v297 = vld [vmem:[#allocation7 + $0xec] sm:$0xf]
    %v298 = vld [vmem:[#allocation7 + $0xf0] sm:$0xff]
    %v299 = vld [vmem:[#allocation7 + $0xf8] sm:$0xf]
    %v300 = vld [vmem:[#allocation7 + $0xfc] sm:$0xff]
    %v301 = vld [vmem:[#allocation7 + $0x104] sm:$0xf]
    %v302 = vld [vmem:[#allocation7 + $0x108] sm:$0xff]
    %v303 = vld [vmem:[#allocation7 + $0x110] sm:$0xf]
    %v304 = vld [vmem:[#allocation7 + $0x114] sm:$0xff]
    %v305 = vld [vmem:[#allocation7 + $0x11c] sm:$0xf]
    %v306 = vld [vmem:[#allocation7 + $0x120] sm:$0xff]
    %v307 = vld [vmem:[#allocation7 + $0x128] sm:$0xf]
    %v308 = vld [vmem:[#allocation7 + $0x12c] sm:$0xff]
    %v309 = vld [vmem:[#allocation7 + $0x134] sm:$0xf]
    %v310 = vld [vmem:[#allocation7 + $0x138] sm:$0xff]
    %v311 = vld [vmem:[#allocation7 + $0x140] sm:$0xf]
    %v312 = vld [vmem:[#allocation7 + $0x144] sm:$0xff]
    %v313 = vld [vmem:[#allocation7 + $0x14c] sm:$0xf]
    %v314 = vld [vmem:[#allocation7 + $0x150] sm:$0xff]
    %v315 = vld [vmem:[#allocation7 + $0x158] sm:$0xf]
    %v316 = vld [vmem:[#allocation7 + $0x15c] sm:$0xff]
    %v317 = vld [vmem:[#allocation7 + $0x164] sm:$0xf]
    %v318 = vld [vmem:[#allocation7 + $0x168] sm:$0xff]
    %v319 = vld [vmem:[#allocation7 + $0x170] sm:$0xf]
    %v320 = vld [vmem:[#allocation7 + $0x174] sm:$0xff]
    %v321 = vld [vmem:[#allocation7 + $0x17c] sm:$0xf]
    %v322 = vld [vmem:[#allocation7 + $0x180] sm:$0xff]
    %v323 = vld [vmem:[#allocation7 + $0x188] sm:$0xf]
    %v324 = vld [vmem:[#allocation7 + $0x18c] sm:$0xff]
    %v325 = vld [vmem:[#allocation7 + $0x194] sm:$0xf]
    %v326 = vld [vmem:[#allocation7 + $0x198] sm:$0xff]
    %v327 = vld [vmem:[#allocation7 + $0x1a0] sm:$0xf]
    %v328 = vld [vmem:[#allocation7 + $0x1a4] sm:$0xff]
    %v329 = vld [vmem:[#allocation7 + $0x1ac] sm:$0xf]
    %v330 = vld [vmem:[#allocation7 + $0x1b0] sm:$0xff]
    %v331 = vld [vmem:[#allocation7 + $0x1b8] sm:$0xf]
    %v332 = vld [vmem:[#allocation7 + $0x1bc] sm:$0xff]
    %v333 = vld [vmem:[#allocation7 + $0x1c4] sm:$0xf]
    %v334 = vld [vmem:[#allocation7 + $0x1c8] sm:$0xff]
    %v335 = vld [vmem:[#allocation7 + $0x1d0] sm:$0xf]
    %v336 = vld [vmem:[#allocation7 + $0x1d4] sm:$0xff]
    %v337 = vld [vmem:[#allocation7 + $0x1dc] sm:$0xf]
    %v338 = vld [vmem:[#allocation7 + $0x1e0] sm:$0xff]
    %v339 = vld [vmem:[#allocation7 + $0x1e8] sm:$0xf]
    %v340 = vld [vmem:[#allocation7 + $0x1ec] sm:$0xff]
    %v341 = vld [vmem:[#allocation7 + $0x1f4] sm:$0xf]
    %v342 = vld [vmem:[#allocation7 + $0x1f8] sm:$0xff]
    %v343 = vld [vmem:[#allocation7 + $0x200] sm:$0xf]
    %v344 = vld [vmem:[#allocation7 + $0x204] sm:$0xff]
    %v345 = vld [vmem:[#allocation7 + $0x20c] sm:$0xf]
    %v346 = vld [vmem:[#allocation7 + $0x210] sm:$0xff]
    %v347 = vld [vmem:[#allocation7 + $0x218] sm:$0xf]
    %v348 = vld [vmem:[#allocation7 + $0x21c] sm:$0xff]
    %v349 = vld [vmem:[#allocation7 + $0x224] sm:$0xf]
    %v350 = vld [vmem:[#allocation7 + $0x228] sm:$0xff]
    %v351 = vld [vmem:[#allocation7 + $0x230] sm:$0xf]
    %v352 = vld [vmem:[#allocation7 + $0x234] sm:$0xff]
    %v353 = vld [vmem:[#allocation7 + $0x23c] sm:$0xf]
    %v354 = vld [vmem:[#allocation7 + $0x240] sm:$0xff]
    %v355 = vld [vmem:[#allocation7 + $0x248] sm:$0xf]
    %v356 = vld [vmem:[#allocation7 + $0x24c] sm:$0xff]
    %v357 = vld [vmem:[#allocation7 + $0x254] sm:$0xf]
    %v358 = vld [vmem:[#allocation7 + $0x258] sm:$0xff]
    %v359 = vld [vmem:[#allocation7 + $0x260] sm:$0xf]
    %v360 = vld [vmem:[#allocation7 + $0x264] sm:$0xff]
    %v361 = vld [vmem:[#allocation7 + $0x26c] sm:$0xf]
    %v362 = vld [vmem:[#allocation7 + $0x270] sm:$0xff]
    %v363 = vld [vmem:[#allocation7 + $0x278] sm:$0xf]
    %v364 = vld [vmem:[#allocation7 + $0x27c] sm:$0xff]
    %v365 = vld [vmem:[#allocation7 + $0x284] sm:$0xf]
    %v366 = vld [vmem:[#allocation7 + $0x288] sm:$0xff]
    %v367 = vld [vmem:[#allocation7 + $0x290] sm:$0xf]
    %v368 = vld [vmem:[#allocation7 + $0x294] sm:$0xff]
    %v369 = vld [vmem:[#allocation7 + $0x29c] sm:$0xf]
    %v370 = vld [vmem:[#allocation7 + $0x2a0] sm:$0xff]
    %v371 = vld [vmem:[#allocation7 + $0x2a8] sm:$0xf]
    %v372 = vld [vmem:[#allocation7 + $0x2ac] sm:$0xff]
    %v373 = vld [vmem:[#allocation7 + $0x2b4] sm:$0xf]
    %v374 = vld [vmem:[#allocation7 + $0x2b8] sm:$0xff]
    %v375 = vld [vmem:[#allocation7 + $0x2c0] sm:$0xf]
    %v376 = vld [vmem:[#allocation7 + $0x2c4] sm:$0xff]
    %v377 = vld [vmem:[#allocation7 + $0x2cc] sm:$0xf]
    %v378 = vld [vmem:[#allocation7 + $0x2d0] sm:$0xff]
    %v379 = vld [vmem:[#allocation7 + $0x2d8] sm:$0xf]
    %v380 = vld [vmem:[#allocation7 + $0x2dc] sm:$0xff]
    %v381 = vld [vmem:[#allocation7 + $0x2e4] sm:$0xf]
    %v382 = vld [vmem:[#allocation7 + $0x2e8] sm:$0xff]
    %v383 = vld [vmem:[#allocation7 + $0x2f0] sm:$0xf]
    %v384 = vld [vmem:[#allocation7 + $0x2f4] sm:$0xff]
    %v385 = vld [vmem:[#allocation7 + $0x2fc] sm:$0xf]
    %v386 = vld [vmem:[%s4] sm:$0x7]
    %v388 = vlaneseq
    %v389 = vshrl.u32 %v388, 7
    %v390 = vsub.s32 0, %v389
    %v391 = vrot.slane %v386, %v390
    %v392 = vlaneseq
    %v393 = vshrl.u32 %v392, 7
    %v394 = vsub.s32 1, %v393
    %v395 = vrot.slane %v386, %v394
    %v396 = vlaneseq
    %v397 = vshrl.u32 %v396, 7
    %v398 = vsub.s32 2, %v397
    %v399 = vrot.slane %v386, %v398
    %v531 = vunpack.c.l.b16 %v258
    %v532 = vunpack.c.h.b16 %v258
    %v533 = vunpack.c.l.b16 %v259
    %v534 = vunpack.c.l.b16 %v260
    %v535 = vunpack.c.h.b16 %v260
    %v536 = vunpack.c.l.b16 %v261
    %v537 = vunpack.c.l.b16 %v262
    %v538 = vunpack.c.h.b16 %v262
    %v539 = vunpack.c.l.b16 %v263
    %v540 = vunpack.c.l.b16 %v264
    %v541 = vunpack.c.h.b16 %v264
    %v542 = vunpack.c.l.b16 %v265
    %v543 = vunpack.c.l.b16 %v266
    %v544 = vunpack.c.h.b16 %v266
    %v545 = vunpack.c.l.b16 %v267
    %v546 = vunpack.c.l.b16 %v268
    %v547 = vunpack.c.h.b16 %v268
    %v548 = vunpack.c.l.b16 %v269
    %v549 = vunpack.c.l.b16 %v270
    %v550 = vunpack.c.h.b16 %v270
    %v551 = vunpack.c.l.b16 %v271
    %v552 = vunpack.c.l.b16 %v272
    %v553 = vunpack.c.h.b16 %v272
    %v554 = vunpack.c.l.b16 %v273
    %v555 = vunpack.c.l.b16 %v274
    %v556 = vunpack.c.h.b16 %v274
    %v557 = vunpack.c.l.b16 %v275
    %v558 = vunpack.c.l.b16 %v276
    %v559 = vunpack.c.h.b16 %v276
    %v560 = vunpack.c.l.b16 %v277
    %v561 = vunpack.c.l.b16 %v278
    %v562 = vunpack.c.h.b16 %v278
    %v563 = vunpack.c.l.b16 %v279
    %v564 = vunpack.c.l.b16 %v280
    %v565 = vunpack.c.h.b16 %v280
    %v566 = vunpack.c.l.b16 %v281
    %v567 = vunpack.c.l.b16 %v282
    %v568 = vunpack.c.h.b16 %v282
    %v569 = vunpack.c.l.b16 %v283
    %v570 = vunpack.c.l.b16 %v284
    %v571 = vunpack.c.h.b16 %v284
    %v572 = vunpack.c.l.b16 %v285
    %v573 = vunpack.c.l.b16 %v286
    %v574 = vunpack.c.h.b16 %v286
    %v575 = vunpack.c.l.b16 %v287
    %v576 = vunpack.c.l.b16 %v288
    %v577 = vunpack.c.h.b16 %v288
    %v578 = vunpack.c.l.b16 %v289
    %v579 = vunpack.c.l.b16 %v290
    %v580 = vunpack.c.h.b16 %v290
    %v581 = vunpack.c.l.b16 %v291
    %v582 = vunpack.c.l.b16 %v292
    %v583 = vunpack.c.h.b16 %v292
    %v584 = vunpack.c.l.b16 %v293
    %v585 = vunpack.c.l.b16 %v294
    %v586 = vunpack.c.h.b16 %v294
    %v587 = vunpack.c.l.b16 %v295
    %v588 = vunpack.c.l.b16 %v296
    %v589 = vunpack.c.h.b16 %v296
    %v590 = vunpack.c.l.b16 %v297
    %v591 = vunpack.c.l.b16 %v298
    %v592 = vunpack.c.h.b16 %v298
    %v593 = vunpack.c.l.b16 %v299
    %v594 = vunpack.c.l.b16 %v300
    %v595 = vunpack.c.h.b16 %v300
    %v596 = vunpack.c.l.b16 %v301
    %v597 = vunpack.c.l.b16 %v302
    %v598 = vunpack.c.h.b16 %v302
    %v599 = vunpack.c.l.b16 %v303
    %v600 = vunpack.c.l.b16 %v304
    %v601 = vunpack.c.h.b16 %v304
    %v602 = vunpack.c.l.b16 %v305
    %v603 = vunpack.c.l.b16 %v306
    %v604 = vunpack.c.h.b16 %v306
    %v605 = vunpack.c.l.b16 %v307
    %v606 = vunpack.c.l.b16 %v308
    %v607 = vunpack.c.h.b16 %v308
    %v608 = vunpack.c.l.b16 %v309
    %v609 = vunpack.c.l.b16 %v310
    %v610 = vunpack.c.h.b16 %v310
    %v611 = vunpack.c.l.b16 %v311
    %v612 = vunpack.c.l.b16 %v312
    %v613 = vunpack.c.h.b16 %v312
    %v614 = vunpack.c.l.b16 %v313
    %v615 = vunpack.c.l.b16 %v314
    %v616 = vunpack.c.h.b16 %v314
    %v617 = vunpack.c.l.b16 %v315
    %v618 = vunpack.c.l.b16 %v316
    %v619 = vunpack.c.h.b16 %v316
    %v620 = vunpack.c.l.b16 %v317
    %v621 = vunpack.c.l.b16 %v318
    %v622 = vunpack.c.h.b16 %v318
    %v623 = vunpack.c.l.b16 %v319
    %v624 = vunpack.c.l.b16 %v320
    %v625 = vunpack.c.h.b16 %v320
    %v626 = vunpack.c.l.b16 %v321
    %v627 = vunpack.c.l.b16 %v322
    %v628 = vunpack.c.h.b16 %v322
    %v629 = vunpack.c.l.b16 %v323
    %v630 = vunpack.c.l.b16 %v324
    %v631 = vunpack.c.h.b16 %v324
    %v632 = vunpack.c.l.b16 %v325
    %v633 = vunpack.c.l.b16 %v326
    %v634 = vunpack.c.h.b16 %v326
    %v635 = vunpack.c.l.b16 %v327
    %v636 = vunpack.c.l.b16 %v328
    %v637 = vunpack.c.h.b16 %v328
    %v638 = vunpack.c.l.b16 %v329
    %v639 = vunpack.c.l.b16 %v330
    %v640 = vunpack.c.h.b16 %v330
    %v641 = vunpack.c.l.b16 %v331
    %v642 = vunpack.c.l.b16 %v332
    %v643 = vunpack.c.h.b16 %v332
    %v644 = vunpack.c.l.b16 %v333
    %v645 = vunpack.c.l.b16 %v334
    %v646 = vunpack.c.h.b16 %v334
    %v647 = vunpack.c.l.b16 %v335
    %v648 = vunpack.c.l.b16 %v336
    %v649 = vunpack.c.h.b16 %v336
    %v650 = vunpack.c.l.b16 %v337
    %v651 = vunpack.c.l.b16 %v338
    %v652 = vunpack.c.h.b16 %v338
    %v653 = vunpack.c.l.b16 %v339
    %v654 = vunpack.c.l.b16 %v340
    %v655 = vunpack.c.h.b16 %v340
    %v656 = vunpack.c.l.b16 %v341
    %v657 = vunpack.c.l.b16 %v342
    %v658 = vunpack.c.h.b16 %v342
    %v659 = vunpack.c.l.b16 %v343
    %v660 = vunpack.c.l.b16 %v344
    %v661 = vunpack.c.h.b16 %v344
    %v662 = vunpack.c.l.b16 %v345
    %v663 = vunpack.c.l.b16 %v346
    %v664 = vunpack.c.h.b16 %v346
    %v665 = vunpack.c.l.b16 %v347
    %v666 = vunpack.c.l.b16 %v348
    %v667 = vunpack.c.h.b16 %v348
    %v668 = vunpack.c.l.b16 %v349
    %v669 = vunpack.c.l.b16 %v350
    %v670 = vunpack.c.h.b16 %v350
    %v671 = vunpack.c.l.b16 %v351
    %v672 = vunpack.c.l.b16 %v352
    %v673 = vunpack.c.h.b16 %v352
    %v674 = vunpack.c.l.b16 %v353
    %v675 = vunpack.c.l.b16 %v354
    %v676 = vunpack.c.h.b16 %v354
    %v677 = vunpack.c.l.b16 %v355
    %v678 = vunpack.c.l.b16 %v356
    %v679 = vunpack.c.h.b16 %v356
    %v680 = vunpack.c.l.b16 %v357
    %v681 = vunpack.c.l.b16 %v358
    %v682 = vunpack.c.h.b16 %v358
    %v683 = vunpack.c.l.b16 %v359
    %v684 = vunpack.c.l.b16 %v360
    %v685 = vunpack.c.h.b16 %v360
    %v686 = vunpack.c.l.b16 %v361
    %v687 = vunpack.c.l.b16 %v362
    %v688 = vunpack.c.h.b16 %v362
    %v689 = vunpack.c.l.b16 %v363
    %v690 = vunpack.c.l.b16 %v364
    %v691 = vunpack.c.h.b16 %v364
    %v692 = vunpack.c.l.b16 %v365
    %v693 = vunpack.c.l.b16 %v366
    %v694 = vunpack.c.h.b16 %v366
    %v695 = vunpack.c.l.b16 %v367
    %v696 = vunpack.c.l.b16 %v368
    %v697 = vunpack.c.h.b16 %v368
    %v698 = vunpack.c.l.b16 %v369
    %v699 = vunpack.c.l.b16 %v370
    %v700 = vunpack.c.h.b16 %v370
    %v701 = vunpack.c.l.b16 %v371
    %v702 = vunpack.c.l.b16 %v372
    %v703 = vunpack.c.h.b16 %v372
    %v704 = vunpack.c.l.b16 %v373
    %v705 = vunpack.c.l.b16 %v374
    %v706 = vunpack.c.h.b16 %v374
    %v707 = vunpack.c.l.b16 %v375
    %v708 = vunpack.c.l.b16 %v376
    %v709 = vunpack.c.h.b16 %v376
    %v710 = vunpack.c.l.b16 %v377
    %v711 = vunpack.c.l.b16 %v378
    %v712 = vunpack.c.h.b16 %v378
    %v713 = vunpack.c.l.b16 %v379
    %v714 = vunpack.c.l.b16 %v380
    %v715 = vunpack.c.h.b16 %v380
    %v716 = vunpack.c.l.b16 %v381
    %v717 = vunpack.c.l.b16 %v382
    %v718 = vunpack.c.h.b16 %v382
    %v719 = vunpack.c.l.b16 %v383
    %v720 = vunpack.c.l.b16 %v384
    %v721 = vunpack.c.h.b16 %v384
    %v722 = vunpack.c.l.b16 %v385
    %v723 = vpack.c.b16 %v534, %v531
    %v724 = vpack.c.b16 %v535, %v532
    %v725 = vpack.c.b16 %v536, %v533
    %v726 = vpack.c.b16 %v540, %v537
    %v727 = vpack.c.b16 %v541, %v538
    %v728 = vpack.c.b16 %v542, %v539
    %v729 = vpack.c.b16 %v546, %v543
    %v730 = vpack.c.b16 %v547, %v544
    %v731 = vpack.c.b16 %v548, %v545
    %v732 = vpack.c.b16 %v552, %v549
    %v733 = vpack.c.b16 %v553, %v550
    %v734 = vpack.c.b16 %v554, %v551
    %v735 = vpack.c.b16 %v558, %v555
    %v736 = vpack.c.b16 %v559, %v556
    %v737 = vpack.c.b16 %v560, %v557
    %v738 = vpack.c.b16 %v564, %v561
    %v739 = vpack.c.b16 %v565, %v562
    %v740 = vpack.c.b16 %v566, %v563
    %v741 = vpack.c.b16 %v570, %v567
    %v742 = vpack.c.b16 %v571, %v568
    %v743 = vpack.c.b16 %v572, %v569
    %v744 = vpack.c.b16 %v576, %v573
    %v745 = vpack.c.b16 %v577, %v574
    %v746 = vpack.c.b16 %v578, %v575
    %v747 = vpack.c.b16 %v582, %v579
    %v748 = vpack.c.b16 %v583, %v580
    %v749 = vpack.c.b16 %v584, %v581
    %v750 = vpack.c.b16 %v588, %v585
    %v751 = vpack.c.b16 %v589, %v586
    %v752 = vpack.c.b16 %v590, %v587
    %v753 = vpack.c.b16 %v594, %v591
    %v754 = vpack.c.b16 %v595, %v592
    %v755 = vpack.c.b16 %v596, %v593
    %v756 = vpack.c.b16 %v600, %v597
    %v757 = vpack.c.b16 %v601, %v598
    %v758 = vpack.c.b16 %v602, %v599
    %v759 = vpack.c.b16 %v606, %v603
    %v760 = vpack.c.b16 %v607, %v604
    %v761 = vpack.c.b16 %v608, %v605
    %v762 = vpack.c.b16 %v612, %v609
    %v763 = vpack.c.b16 %v613, %v610
    %v764 = vpack.c.b16 %v614, %v611
    %v765 = vpack.c.b16 %v618, %v615
    %v766 = vpack.c.b16 %v619, %v616
    %v767 = vpack.c.b16 %v620, %v617
    %v768 = vpack.c.b16 %v624, %v621
    %v769 = vpack.c.b16 %v625, %v622
    %v770 = vpack.c.b16 %v626, %v623
    %v771 = vpack.c.b16 %v630, %v627
    %v772 = vpack.c.b16 %v631, %v628
    %v773 = vpack.c.b16 %v632, %v629
    %v774 = vpack.c.b16 %v636, %v633
    %v775 = vpack.c.b16 %v637, %v634
    %v776 = vpack.c.b16 %v638, %v635
    %v777 = vpack.c.b16 %v642, %v639
    %v778 = vpack.c.b16 %v643, %v640
    %v779 = vpack.c.b16 %v644, %v641
    %v780 = vpack.c.b16 %v648, %v645
    %v781 = vpack.c.b16 %v649, %v646
    %v782 = vpack.c.b16 %v650, %v647
    %v783 = vpack.c.b16 %v654, %v651
    %v784 = vpack.c.b16 %v655, %v652
    %v785 = vpack.c.b16 %v656, %v653
    %v786 = vpack.c.b16 %v660, %v657
    %v787 = vpack.c.b16 %v661, %v658
    %v788 = vpack.c.b16 %v662, %v659
    %v789 = vpack.c.b16 %v666, %v663
    %v790 = vpack.c.b16 %v667, %v664
    %v791 = vpack.c.b16 %v668, %v665
    %v792 = vpack.c.b16 %v672, %v669
    %v793 = vpack.c.b16 %v673, %v670
    %v794 = vpack.c.b16 %v674, %v671
    %v795 = vpack.c.b16 %v678, %v675
    %v796 = vpack.c.b16 %v679, %v676
    %v797 = vpack.c.b16 %v680, %v677
    %v798 = vpack.c.b16 %v684, %v681
    %v799 = vpack.c.b16 %v685, %v682
    %v800 = vpack.c.b16 %v686, %v683
    %v801 = vpack.c.b16 %v690, %v687
    %v802 = vpack.c.b16 %v691, %v688
    %v803 = vpack.c.b16 %v692, %v689
    %v804 = vpack.c.b16 %v696, %v693
    %v805 = vpack.c.b16 %v697, %v694
    %v806 = vpack.c.b16 %v698, %v695
    %v807 = vpack.c.b16 %v702, %v699
    %v808 = vpack.c.b16 %v703, %v700
    %v809 = vpack.c.b16 %v704, %v701
    %v810 = vpack.c.b16 %v708, %v705
    %v811 = vpack.c.b16 %v709, %v706
    %v812 = vpack.c.b16 %v710, %v707
    %v813 = vpack.c.b16 %v714, %v711
    %v814 = vpack.c.b16 %v715, %v712
    %v815 = vpack.c.b16 %v716, %v713
    %v816 = vpack.c.b16 %v720, %v717
    %v817 = vpack.c.b16 %v721, %v718
    %v818 = vpack.c.b16 %v722, %v719
    %915 = vmatprep.subr.bf16.mxu0 %v724
    %916 = vmatpush1.bf16.msra.mxu0 %v723
    %917 = vmatprep.subr.bf16.mxu0 %v727
    %918 = vmatpush1.bf16.msra.mxu0 %v726
    %919 = vmatprep.subr.bf16.mxu0 %v730
    %920 = vmatpush1.bf16.msra.mxu0 %v729
    %921 = vmatprep.subr.bf16.mxu0 %v733
    %922 = vmatpush1.bf16.msra.mxu0 %v732
    %923 = vmatprep.subr.bf16.mxu0 %v736
    %924 = vmatpush1.bf16.msra.mxu0 %v735
    %925 = vmatprep.subr.bf16.mxu0 %v739
    %926 = vmatpush1.bf16.msra.mxu0 %v738
    %927 = vmatprep.subr.bf16.mxu0 %v742
    %928 = vmatpush1.bf16.msra.mxu0 %v741
    %929 = vmatprep.subr.bf16.mxu0 %v745
    %930 = vmatpush1.bf16.msra.mxu0 %v744
    %931 = vmatprep.subr.bf16.mxu0 %v748
    %932 = vmatpush1.bf16.msra.mxu0 %v747
    %933 = vmatprep.subr.bf16.mxu0 %v751
    %934 = vmatpush1.bf16.msra.mxu0 %v750
    %935 = vmatprep.subr.bf16.mxu0 %v754
    %936 = vmatpush1.bf16.msra.mxu0 %v753
    %937 = vmatprep.subr.bf16.mxu0 %v757
    %938 = vmatpush1.bf16.msra.mxu0 %v756
    %939 = vmatprep.subr.bf16.mxu0 %v760
    %940 = vmatpush1.bf16.msra.mxu0 %v759
    %941 = vmatprep.subr.bf16.mxu0 %v763
    %942 = vmatpush1.bf16.msra.mxu0 %v762
    %943 = vmatprep.subr.bf16.mxu0 %v766
    %944 = vmatpush1.bf16.msra.mxu0 %v765
    %945 = vmatprep.subr.bf16.mxu0 %v769
    %946 = vmatpush1.bf16.msra.mxu0 %v768
    %947 = vmatprep.mubr.bf16.mxu0 %v255
    %948 = vmatmul.mubr.bf16.gmra.mrb[0].mxu0 %v254
    %v949 = vpop.f32.mrb[0].mxu0
    %v950 = vadd.f32 %v391, %v949
    %v951 = vpop.f32.mrb[0].mxu0
    %v952 = vadd.f32 %v395, %v951
    %v953 = vpop.f32.mrb[0].mxu0
    %v954 = vadd.f32 %v391, %v953
    %v955 = vpop.f32.mrb[0].mxu0
    %v956 = vadd.f32 %v395, %v955
    %957 = vdwg.mxu0
    %958 = vmatprep.subr.bf16.mxu0 %v772
    %959 = vmatpush1.bf16.msra.mxu0 %v771
    %960 = vmatprep.subr.bf16.mxu0 %v775
    %961 = vmatpush1.bf16.msra.mxu0 %v774
    %962 = vmatprep.subr.bf16.mxu0 %v778
    %963 = vmatpush1.bf16.msra.mxu0 %v777
    %964 = vmatprep.subr.bf16.mxu0 %v781
    %965 = vmatpush1.bf16.msra.mxu0 %v780
    %966 = vmatprep.subr.bf16.mxu0 %v784
    %967 = vmatpush1.bf16.msra.mxu0 %v783
    %968 = vmatprep.subr.bf16.mxu0 %v787
    %969 = vmatpush1.bf16.msra.mxu0 %v786
    %970 = vmatprep.subr.bf16.mxu0 %v790
    %971 = vmatpush1.bf16.msra.mxu0 %v789
    %972 = vmatprep.subr.bf16.mxu0 %v793
    %973 = vmatpush1.bf16.msra.mxu0 %v792
    %974 = vmatprep.subr.bf16.mxu0 %v796
    %975 = vmatpush1.bf16.msra.mxu0 %v795
    %976 = vmatprep.subr.bf16.mxu0 %v799
    %977 = vmatpush1.bf16.msra.mxu0 %v798
    %978 = vmatprep.subr.bf16.mxu0 %v802
    %979 = vmatpush1.bf16.msra.mxu0 %v801
    %980 = vmatprep.subr.bf16.mxu0 %v805
    %981 = vmatpush1.bf16.msra.mxu0 %v804
    %982 = vmatprep.subr.bf16.mxu0 %v808
    %983 = vmatpush1.bf16.msra.mxu0 %v807
    %984 = vmatprep.subr.bf16.mxu0 %v811
    %985 = vmatpush1.bf16.msra.mxu0 %v810
    %986 = vmatprep.subr.bf16.mxu0 %v814
    %987 = vmatpush1.bf16.msra.mxu0 %v813
    %988 = vmatprep.subr.bf16.mxu0 %v817
    %989 = vmatpush1.bf16.msra.mxu0 %v816
    %990 = vmatprep.mubr.bf16.mxu0 %v257
    %991 = vmatmul.mubr.bf16.gmra.mrb[0].mxu0 %v256
    %v992 = vpop.f32.mrb[0].mxu0
    %v993 = vadd.f32 %v950, %v992
    %v994 = vpop.f32.mrb[0].mxu0
    %v995 = vadd.f32 %v952, %v994
    %v996 = vpop.f32.mrb[0].mxu0
    %v997 = vadd.f32 %v954, %v996
    %v998 = vpop.f32.mrb[0].mxu0
    %v999 = vadd.f32 %v956, %v998
    %1000 = vdwg.mxu0
    %1001 = vmatprep.subr.bf16.mxu0 0
    %1002 = vmatpush1.bf16.msra.mxu0 %v725
    %1003 = vmatprep.subr.bf16.mxu0 0
    %1004 = vmatpush1.bf16.msra.mxu0 %v728
    %1005 = vmatprep.subr.bf16.mxu0 0
    %1006 = vmatpush1.bf16.msra.mxu0 %v731
    %1007 = vmatprep.subr.bf16.mxu0 0
    %1008 = vmatpush1.bf16.msra.mxu0 %v734
    %1009 = vmatprep.subr.bf16.mxu0 0
    %1010 = vmatpush1.bf16.msra.mxu0 %v737
    %1011 = vmatprep.subr.bf16.mxu0 0
    %1012 = vmatpush1.bf16.msra.mxu0 %v740
    %1013 = vmatprep.subr.bf16.mxu0 0
    %1014 = vmatpush1.bf16.msra.mxu0 %v743
    %1015 = vmatprep.subr.bf16.mxu0 0
    %1016 = vmatpush1.bf16.msra.mxu0 %v746
    %1017 = vmatprep.subr.bf16.mxu0 0
    %1018 = vmatpush1.bf16.msra.mxu0 %v749
    %1019 = vmatprep.subr.bf16.mxu0 0
    %1020 = vmatpush1.bf16.msra.mxu0 %v752
    %1021 = vmatprep.subr.bf16.mxu0 0
    %1022 = vmatpush1.bf16.msra.mxu0 %v755
    %1023 = vmatprep.subr.bf16.mxu0 0
    %1024 = vmatpush1.bf16.msra.mxu0 %v758
    %1025 = vmatprep.subr.bf16.mxu0 0
    %1026 = vmatpush1.bf16.msra.mxu0 %v761
    %1027 = vmatprep.subr.bf16.mxu0 0
    %1028 = vmatpush1.bf16.msra.mxu0 %v764
    %1029 = vmatprep.subr.bf16.mxu0 0
    %1030 = vmatpush1.bf16.msra.mxu0 %v767
    %1031 = vmatprep.subr.bf16.mxu0 0
    %1032 = vmatpush1.bf16.msra.mxu0 %v770
    %1033 = vmatprep.mubr.bf16.mxu0 %v255
    %1034 = vmatmul.mubr.bf16.gmra.mrb[0].mxu0 %v254
    %v1035 = vpop.f32.mrb[0].mxu0
    %v1036 = vadd.f32 %v399, %v1035
    %v1037 = vpop.f32.mrb[0].mxu0
    %v1038 = vpop.f32.mrb[0].mxu0
    %v1039 = vadd.f32 %v399, %v1038
    %v1040 = vpop.f32.mrb[0].mxu0
    %1041 = vdwg.mxu0
    %1042 = vmatprep.subr.bf16.mxu0 0
    %1043 = vmatpush1.bf16.msra.mxu0 %v773
    %1044 = vmatprep.subr.bf16.mxu0 0
    %1045 = vmatpush1.bf16.msra.mxu0 %v776
    %1046 = vmatprep.subr.bf16.mxu0 0
    %1047 = vmatpush1.bf16.msra.mxu0 %v779
    %1048 = vmatprep.subr.bf16.mxu0 0
    %1049 = vmatpush1.bf16.msra.mxu0 %v782
    %1050 = vmatprep.subr.bf16.mxu0 0
    %1051 = vmatpush1.bf16.msra.mxu0 %v785
    %1052 = vmatprep.subr.bf16.mxu0 0
    %1053 = vmatpush1.bf16.msra.mxu0 %v788
    %1054 = vmatprep.subr.bf16.mxu0 0
    %1055 = vmatpush1.bf16.msra.mxu0 %v791
    %1056 = vmatprep.subr.bf16.mxu0 0
    %1057 = vmatpush1.bf16.msra.mxu0 %v794
    %1058 = vmatprep.subr.bf16.mxu0 0
    %1059 = vmatpush1.bf16.msra.mxu0 %v797
    %1060 = vmatprep.subr.bf16.mxu0 0
    %1061 = vmatpush1.bf16.msra.mxu0 %v800
    %1062 = vmatprep.subr.bf16.mxu0 0
    %1063 = vmatpush1.bf16.msra.mxu0 %v803
    %1064 = vmatprep.subr.bf16.mxu0 0
    %1065 = vmatpush1.bf16.msra.mxu0 %v806
    %1066 = vmatprep.subr.bf16.mxu0 0
    %1067 = vmatpush1.bf16.msra.mxu0 %v809
    %1068 = vmatprep.subr.bf16.mxu0 0
    %1069 = vmatpush1.bf16.msra.mxu0 %v812
    %1070 = vmatprep.subr.bf16.mxu0 0
    %1071 = vmatpush1.bf16.msra.mxu0 %v815
    %1072 = vmatprep.subr.bf16.mxu0 0
    %1073 = vmatpush1.bf16.msra.mxu0 %v818
    %1074 = vmatprep.mubr.bf16.mxu0 %v257
    %1075 = vmatmul.mubr.bf16.gmra.mrb[0].mxu0 %v256
    %v1076 = vpop.f32.mrb[0].mxu0
    %v1077 = vadd.f32 %v1036, %v1076
    %v1078 = vpop.f32.mrb[0].mxu0
    %v1079 = vpop.f32.mrb[0].mxu0
    %v1080 = vadd.f32 %v1039, %v1079
    %v1081 = vpop.f32.mrb[0].mxu0
    %1082 = vdwg.mxu0
    %v1083 = vmax.f32 %v993, 0.0
    %v1084 = vmax.f32 %v995, 0.0
    %v1085 = vmax.f32 %v1077, 0.0
    %v1086 = vmax.f32 %v997, 0.0
    %v1087 = vmax.f32 %v999, 0.0
    %v1088 = vmax.f32 %v1080, 0.0
    %v1089 = vpack.c.bf16 %v1086, %v1083
    %v1090 = vpack.c.bf16 %v1087, %v1084
    %v1091 = vpack.c.bf16 %v1088, %v1085
    %v1092 = vld [vmem:[#allocation8] sm:$0xf]
    %v1093 = vld [vmem:[#allocation8 + $0x4] sm:$0xf]
    %v1094 = vld [vmem:[#allocation8 + $0x8] sm:$0xf]
    %v1095 = vld [vmem:[#allocation8 + $0xc] sm:$0xf]
    %v1096 = vld [vmem:[#allocation8 + $0x10] sm:$0xf]
    %v1097 = vld [vmem:[#allocation8 + $0x14] sm:$0xf]
    %v1098 = vld [vmem:[#allocation8 + $0x18] sm:$0xf]
    %v1099 = vld [vmem:[#allocation8 + $0x1c] sm:$0xf]
    %v1100 = vld [vmem:[#allocation8 + $0x20] sm:$0xf]
    %v1101 = vld [vmem:[#allocation8 + $0x24] sm:$0xf]
    %v1102 = vld [vmem:[#allocation8 + $0x28] sm:$0xf]
    %v1103 = vld [vmem:[#allocation8 + $0x2c] sm:$0xf]
    %v1104 = vld [vmem:[#allocation8 + $0x30] sm:$0xf]
    %v1105 = vld [vmem:[#allocation8 + $0x34] sm:$0xf]
    %v1106 = vld [vmem:[#allocation8 + $0x38] sm:$0xf]
    %v1107 = vld [vmem:[#allocation8 + $0x3c] sm:$0xf]
    %v1108 = vld [vmem:[#allocation8 + $0x40] sm:$0xf]
    %v1109 = vld [vmem:[#allocation8 + $0x44] sm:$0xf]
    %v1110 = vld [vmem:[#allocation8 + $0x48] sm:$0xf]
    %v1111 = vld [vmem:[#allocation8 + $0x4c] sm:$0xf]
    %v1112 = vld [vmem:[#allocation8 + $0x50] sm:$0xf]
    %v1113 = vld [vmem:[#allocation8 + $0x54] sm:$0xf]
    %v1114 = vld [vmem:[#allocation8 + $0x58] sm:$0xf]
    %v1115 = vld [vmem:[#allocation8 + $0x5c] sm:$0xf]
    %v1116 = vld [vmem:[#allocation8 + $0x60] sm:$0xf]
    %v1117 = vld [vmem:[#allocation8 + $0x64] sm:$0xf]
    %v1118 = vld [vmem:[#allocation8 + $0x68] sm:$0xf]
    %v1119 = vld [vmem:[#allocation8 + $0x6c] sm:$0xf]
    %v1120 = vld [vmem:[#allocation8 + $0x70] sm:$0xf]
    %v1121 = vld [vmem:[#allocation8 + $0x74] sm:$0xf]
    %v1122 = vld [vmem:[#allocation8 + $0x78] sm:$0xf]
    %v1123 = vld [vmem:[#allocation8 + $0x7c] sm:$0xf]
    %v1124 = vld [vmem:[#allocation8 + $0x80] sm:$0xf]
    %v1125 = vld [vmem:[#allocation8 + $0x84] sm:$0xf]
    %v1126 = vld [vmem:[#allocation8 + $0x88] sm:$0xf]
    %v1127 = vld [vmem:[#allocation8 + $0x8c] sm:$0xf]
    %v1128 = vld [vmem:[#allocation8 + $0x90] sm:$0xf]
    %v1129 = vld [vmem:[#allocation8 + $0x94] sm:$0xf]
    %v1130 = vld [vmem:[#allocation8 + $0x98] sm:$0xf]
    %v1131 = vld [vmem:[#allocation8 + $0x9c] sm:$0xf]
    %v1132 = vld [vmem:[#allocation8 + $0xa0] sm:$0xf]
    %v1133 = vld [vmem:[#allocation8 + $0xa4] sm:$0xf]
    %v1134 = vld [vmem:[#allocation8 + $0xa8] sm:$0xf]
    %v1135 = vld [vmem:[#allocation8 + $0xac] sm:$0xf]
    %v1136 = vld [vmem:[#allocation8 + $0xb0] sm:$0xf]
    %v1137 = vld [vmem:[#allocation8 + $0xb4] sm:$0xf]
    %v1138 = vld [vmem:[#allocation8 + $0xb8] sm:$0xf]
    %v1139 = vld [vmem:[#allocation8 + $0xbc] sm:$0xf]
    %v1140 = vld [vmem:[%s6] sm:$0x1]
    %v1142 = vlaneseq
    %v1143 = vshrl.u32 %v1142, 7
    %v1144 = vsub.s32 0, %v1143
    %v1145 = vrot.slane %v1140, %v1144
    %v1195 = vunpack.c.l.b16 %v1092
    %v1196 = vunpack.c.l.b16 %v1093
    %v1197 = vunpack.c.l.b16 %v1094
    %v1198 = vunpack.c.l.b16 %v1095
    %v1199 = vunpack.c.l.b16 %v1096
    %v1200 = vunpack.c.l.b16 %v1097
    %v1201 = vunpack.c.l.b16 %v1098
    %v1202 = vunpack.c.l.b16 %v1099
    %v1203 = vunpack.c.l.b16 %v1100
    %v1204 = vunpack.c.l.b16 %v1101
    %v1205 = vunpack.c.l.b16 %v1102
    %v1206 = vunpack.c.l.b16 %v1103
    %v1207 = vunpack.c.l.b16 %v1104
    %v1208 = vunpack.c.l.b16 %v1105
    %v1209 = vunpack.c.l.b16 %v1106
    %v1210 = vunpack.c.l.b16 %v1107
    %v1211 = vunpack.c.l.b16 %v1108
    %v1212 = vunpack.c.l.b16 %v1109
    %v1213 = vunpack.c.l.b16 %v1110
    %v1214 = vunpack.c.l.b16 %v1111
    %v1215 = vunpack.c.l.b16 %v1112
    %v1216 = vunpack.c.l.b16 %v1113
    %v1217 = vunpack.c.l.b16 %v1114
    %v1218 = vunpack.c.l.b16 %v1115
    %v1219 = vunpack.c.l.b16 %v1116
    %v1220 = vunpack.c.l.b16 %v1117
    %v1221 = vunpack.c.l.b16 %v1118
    %v1222 = vunpack.c.l.b16 %v1119
    %v1223 = vunpack.c.l.b16 %v1120
    %v1224 = vunpack.c.l.b16 %v1121
    %v1225 = vunpack.c.l.b16 %v1122
    %v1226 = vunpack.c.l.b16 %v1123
    %v1227 = vunpack.c.l.b16 %v1124
    %v1228 = vunpack.c.l.b16 %v1125
    %v1229 = vunpack.c.l.b16 %v1126
    %v1230 = vunpack.c.l.b16 %v1127
    %v1231 = vunpack.c.l.b16 %v1128
    %v1232 = vunpack.c.l.b16 %v1129
    %v1233 = vunpack.c.l.b16 %v1130
    %v1234 = vunpack.c.l.b16 %v1131
    %v1235 = vunpack.c.l.b16 %v1132
    %v1236 = vunpack.c.l.b16 %v1133
    %v1237 = vunpack.c.l.b16 %v1134
    %v1238 = vunpack.c.l.b16 %v1135
    %v1239 = vunpack.c.l.b16 %v1136
    %v1240 = vunpack.c.l.b16 %v1137
    %v1241 = vunpack.c.l.b16 %v1138
    %v1242 = vunpack.c.l.b16 %v1139
    %v1243 = vpack.c.b16 %v1196, %v1195
    %v1244 = vpack.c.b16 %v1198, %v1197
    %v1245 = vpack.c.b16 %v1200, %v1199
    %v1246 = vpack.c.b16 %v1202, %v1201
    %v1247 = vpack.c.b16 %v1204, %v1203
    %v1248 = vpack.c.b16 %v1206, %v1205
    %v1249 = vpack.c.b16 %v1208, %v1207
    %v1250 = vpack.c.b16 %v1210, %v1209
    %v1251 = vpack.c.b16 %v1212, %v1211
    %v1252 = vpack.c.b16 %v1214, %v1213
    %v1253 = vpack.c.b16 %v1216, %v1215
    %v1254 = vpack.c.b16 %v1218, %v1217
    %v1255 = vpack.c.b16 %v1220, %v1219
    %v1256 = vpack.c.b16 %v1222, %v1221
    %v1257 = vpack.c.b16 %v1224, %v1223
    %v1258 = vpack.c.b16 %v1226, %v1225
    %v1259 = vpack.c.b16 %v1228, %v1227
    %v1260 = vpack.c.b16 %v1230, %v1229
    %v1261 = vpack.c.b16 %v1232, %v1231
    %v1262 = vpack.c.b16 %v1234, %v1233
    %v1263 = vpack.c.b16 %v1236, %v1235
    %v1264 = vpack.c.b16 %v1238, %v1237
    %v1265 = vpack.c.b16 %v1240, %v1239
    %v1266 = vpack.c.b16 %v1242, %v1241
    %1291 = vmatprep.subr.bf16.mxu0 0
    %1292 = vmatpush1.bf16.msra.mxu0 %v1243
    %1293 = vmatprep.subr.bf16.mxu0 0
    %1294 = vmatpush1.bf16.msra.mxu0 %v1244
    %1295 = vmatprep.subr.bf16.mxu0 0
    %1296 = vmatpush1.bf16.msra.mxu0 %v1245
    %1297 = vmatprep.subr.bf16.mxu0 0
    %1298 = vmatpush1.bf16.msra.mxu0 %v1246
    %1299 = vmatprep.subr.bf16.mxu0 0
    %1300 = vmatpush1.bf16.msra.mxu0 %v1247
    %1301 = vmatprep.subr.bf16.mxu0 0
    %1302 = vmatpush1.bf16.msra.mxu0 %v1248
    %1303 = vmatprep.subr.bf16.mxu0 0
    %1304 = vmatpush1.bf16.msra.mxu0 %v1249
    %1305 = vmatprep.subr.bf16.mxu0 0
    %1306 = vmatpush1.bf16.msra.mxu0 %v1250
    %1307 = vmatprep.subr.bf16.mxu0 0
    %1308 = vmatpush1.bf16.msra.mxu0 %v1251
    %1309 = vmatprep.subr.bf16.mxu0 0
    %1310 = vmatpush1.bf16.msra.mxu0 %v1252
    %1311 = vmatprep.subr.bf16.mxu0 0
    %1312 = vmatpush1.bf16.msra.mxu0 %v1253
    %1313 = vmatprep.subr.bf16.mxu0 0
    %1314 = vmatpush1.bf16.msra.mxu0 %v1254
    %1315 = vmatprep.subr.bf16.mxu0 0
    %1316 = vmatpush1.bf16.msra.mxu0 %v1255
    %1317 = vmatprep.subr.bf16.mxu0 0
    %1318 = vmatpush1.bf16.msra.mxu0 %v1256
    %1319 = vmatprep.subr.bf16.mxu0 0
    %1320 = vmatpush1.bf16.msra.mxu0 %v1257
    %1321 = vmatprep.subr.bf16.mxu0 0
    %1322 = vmatpush1.bf16.msra.mxu0 %v1258
    %1323 = vmatprep.mubr.bf16.mxu0 %v1090
    %1324 = vmatmul.mubr.bf16.gmra.mrb[0].mxu0 %v1089
    %v1325 = vpop.f32.mrb[0].mxu0
    %v1326 = vadd.f32 %v1145, %v1325
    %v1327 = vpop.f32.mrb[0].mxu0
    %v1328 = vpop.f32.mrb[0].mxu0
    %v1329 = vadd.f32 %v1145, %v1328
    %v1330 = vpop.f32.mrb[0].mxu0
    %1331 = vdwg.mxu0
    %1332 = vmatprep.subr.bf16.mxu0 0
    %1333 = vmatpush1.bf16.msra.mxu0 %v1259
    %1334 = vmatprep.subr.bf16.mxu0 0
    %1335 = vmatpush1.bf16.msra.mxu0 %v1260
    %1336 = vmatprep.subr.bf16.mxu0 0
    %1337 = vmatpush1.bf16.msra.mxu0 %v1261
    %1338 = vmatprep.subr.bf16.mxu0 0
    %1339 = vmatpush1.bf16.msra.mxu0 %v1262
    %1340 = vmatprep.subr.bf16.mxu0 0
    %1341 = vmatpush1.bf16.msra.mxu0 %v1263
    %1342 = vmatprep.subr.bf16.mxu0 0
    %1343 = vmatpush1.bf16.msra.mxu0 %v1264
    %1344 = vmatprep.subr.bf16.mxu0 0
    %1345 = vmatpush1.bf16.msra.mxu0 %v1265
    %1346 = vmatprep.subr.bf16.mxu0 0
    %1347 = vmatpush1.bf16.msra.mxu0 %v1266
    %1348 = vmatprep.subr.bf16.mxu0 0
    %1349 = vmatpush1.bf16.msra.mxu0 0
    %1350 = vmatprep.subr.bf16.mxu0 0
    %1351 = vmatpush1.bf16.msra.mxu0 0
    %1352 = vmatprep.subr.bf16.mxu0 0
    %1353 = vmatpush1.bf16.msra.mxu0 0
    %1354 = vmatprep.subr.bf16.mxu0 0
    %1355 = vmatpush1.bf16.msra.mxu0 0
    %1356 = vmatprep.subr.bf16.mxu0 0
    %1357 = vmatpush1.bf16.msra.mxu0 0
    %1358 = vmatprep.subr.bf16.mxu0 0
    %1359 = vmatpush1.bf16.msra.mxu0 0
    %1360 = vmatprep.subr.bf16.mxu0 0
    %1361 = vmatpush1.bf16.msra.mxu0 0
    %1362 = vmatprep.subr.bf16.mxu0 0
    %1363 = vmatpush1.bf16.msra.mxu0 0
    %1364 = vmatprep.mubr.bf16.mxu0 0
    %1365 = vmatmul.mubr.bf16.gmra.mrb[0].mxu0 %v1091
    %v1366 = vpop.f32.mrb[0].mxu0
    %v1367 = vadd.f32 %v1326, %v1366
    %v1368 = vpop.f32.mrb[0].mxu0
    %v1369 = vpop.f32.mrb[0].mxu0
    %v1370 = vadd.f32 %v1329, %v1369
    %v1371 = vpop.f32.mrb[0].mxu0
    %1372 = vdwg.mxu0
    %v1373 = vtanh.pop %v1367
    %v1374 = vtanh.pop %v1370
    %v1375 = vmul.f32 %v1373, 2.0
    %v1376 = vmul.f32 %v1374, 2.0
    %v1377 = vpack.c.bf16 %v1376, %v1375
    %v1379 = vunpack.c.l.b16 %v1377
    %v1380 = vunpack.c.h.b16 %v1377
    %v1381 = vpack.c.b16 %v1379, %v1379
    %v1382 = vpack.c.b16 %v1380, %v1380
    %1385 = vst [vmem:[#allocation10] sm:$0xf] %v1381
    %1386 = vst [vmem:[#allocation10 + $0x4] sm:$0xf] %v1382
    // Predicated region
    $region46: #{tpu_custom_call.1} parent=1 // pred_check
      _
    $region47: #{tpu_custom_call.1} parent=1 // pred_check_branch
      %1388 = sbr.rel (0) target = $region49
    $region48: #{tpu_custom_call.1} parent=1 // pred_region
      %s1390 = ssub.s32 128, 128
      %1391 = vsyncadd [#allocation4], %s1390
      %s1392 = sshll.u32 [#allocation10], 4
      %s1393 = int_to_ptr.vmem [resolvable:$true] %s1392
      %1398 = dma.vmem_to_hbm [thread:$0]  %s1393, 128, %s7, [#allocation4], 64, 64, 4
    $region49: #{tpu_custom_call.1} parent=1 // pred_fallthru
      _
    // Predicated region
    $region50: #{tpu_custom_call.1} parent=1 // pred_check
      _
    $region51: #{tpu_custom_call.1} parent=1 // pred_check_branch
      %1400 = sbr.rel (0) target = $region53
    $region52: #{tpu_custom_call.1} parent=1 // pred_region
      %1401 = dma.done [#allocation4], 128
    $region53: #{tpu_custom_call.1} parent=1 // pred_fallthru
      _
    %1402 = vsyncpa [#allocation3], 1
    %1403 = vsyncpa [#allocation6], 1
    %1404 = vsyncpa [#allocation9], 1
    %1405 = vsyncpa [#allocation4], 1

</llo_original>
